<compile_context>
chip_gen: v6e
topology: v6e:2x2x1
jax: 0.10.0
libtpu: 0.0.40
codegen_flags: <defaults>
</compile_context>

<pallas_src>
import functools

import jax
import jax.numpy as jnp
from jax.experimental import pallas as pl
from jax.experimental.pallas import tpu as pltpu

_LANES = 128
_MAX_TILE_ROWS = 8192          # (8192, 128) f32 block = 4 MiB
_NUM_SLICES = 2                # split across the 2 TensorCores on v7x
_MIN_BLOCKS_FOR_SPLIT = 8      # skip the split (and its clamped dup DMA) on small inputs
_VMEM_LIMIT_BYTES = 32 * 1024 * 1024


def _point_loss_kernel(pred_ref, gt_ref, sum_ref, cnt_ref, *,
                       rows, tile_rows, steps_per_slice, may_need_mask):
    p = pl.program_id(0)   # parallel slice (TensorCore on v7x)
    i = pl.program_id(1)   # reduction step within slice

    @pl.when(i == 0)
    def _():
        sum_ref[...] = jnp.zeros_like(sum_ref)
        cnt_ref[...] = jnp.zeros_like(cnt_ref)

    gt = gt_ref[...].astype(jnp.float32)
    pred = pred_ref[...].astype(jnp.float32)

    def accumulate(pos):
        # where-select (never multiply-by-mask) so undefined OOB / clamped data
        # can never leak NaN/Inf into the result.
        diff = jnp.where(pos, pred - gt, 0.0)
        ones = jnp.where(pos, 1.0, 0.0)
        # (tile_rows,128) -> (tile_rows//8, 8, 128) matches the (8,128) vreg
        # tiling, so the reshape is a no-op relayout; axis-0 sum is a cross-vreg
        # VPU add tree into the lane-dense (8,128) resident accumulator.
        sum_ref[...] += jnp.sum((diff * diff).reshape(-1, 8, _LANES), axis=0)
        cnt_ref[...] += jnp.sum(ones.reshape(-1, 8, _LANES), axis=0)

    if may_need_mask:
        row0 = (p * steps_per_slice + i) * tile_rows
        needs_mask = row0 + tile_rows > rows   # partial last block or clamped dup

        @pl.when(needs_mask)
        def _():
            local_row = jax.lax.broadcasted_iota(
                jnp.int32, (tile_rows, _LANES), 0)
            accumulate(((row0 + local_row) < rows) & (gt > 0.0))

        @pl.when(jnp.logical_not(needs_mask))
        def _():
            accumulate(gt > 0.0)
    else:
        # Statically known: every block is fully in-bounds and un-clamped.
        accumulate(gt > 0.0)


@jax.jit
def point_loss(pred, gt):
    """sum((pred[gt>0] - gt[gt>0])**2) / (count(gt>0) + 1e-4), scalar f32."""
    assert pred.shape == gt.shape
    n = pred.size
    if n == 0:  # degenerate: 0 / (0 + 1e-4)
        return jnp.float32(0.0)

    # Keep the input dtype through the DMA (bf16 stays bf16 -> half HBM bytes);
    # cast to f32 inside the kernel.
    pred_f = pred.reshape(-1)
    gt_f = gt.reshape(-1)

    # Pad to the dtype's native sublane tile (8/16/32 rows of 128 lanes for
    # 4/2/1-byte dtypes). gt is zero-padded, so padding is excluded by gt>0.
    pack = max({4: 8, 2: 16, 1: 32}.get(jnp.dtype(pred.dtype).itemsize, 8),
               {4: 8, 2: 16, 1: 32}.get(jnp.dtype(gt.dtype).itemsize, 8))
    pad_to = pack * _LANES
    n_pad = (-n) % pad_to
    if n_pad:
        pred_f = jnp.pad(pred_f, (0, n_pad))
        gt_f = jnp.pad(gt_f, (0, n_pad))

    rows = (n + n_pad) // _LANES           # multiple of `pack`
    pred2d = pred_f.reshape(rows, _LANES)
    gt2d = gt_f.reshape(rows, _LANES)

    tile_rows = min(_MAX_TILE_ROWS, rows)  # multiple of `pack`, <= rows
    total_blocks = pl.cdiv(rows, tile_rows)
    num_slices = _NUM_SLICES if total_blocks >= _MIN_BLOCKS_FOR_SPLIT else 1
    steps_per_slice = pl.cdiv(total_blocks, num_slices)

    # Masking is only ever needed for a partial last block or a clamped
    # duplicate step; if neither can occur the kernel emits no mask code at all.
    may_need_mask = (rows % tile_rows != 0) or \
                    (num_slices * steps_per_slice != total_blocks)

    def in_map(p, i):
        blk = p * steps_per_slice + i
        # Clamp: steps past the end re-read the last block; their contribution
        # is zeroed by the in-kernel index mask.
        return (jnp.minimum(blk, total_blocks - 1), 0)

    kernel = functools.partial(
        _point_loss_kernel,
        rows=rows, tile_rows=tile_rows, steps_per_slice=steps_per_slice,
        may_need_mask=may_need_mask)

    part_sum, part_cnt = pl.pallas_call(
        kernel,
        out_shape=(
            jax.ShapeDtypeStruct((num_slices * 8, _LANES), jnp.float32),
            jax.ShapeDtypeStruct((num_slices * 8, _LANES), jnp.float32),
        ),
        grid_spec=pltpu.PrefetchScalarGridSpec(
            num_scalar_prefetch=0,
            grid=(num_slices, steps_per_slice),
            in_specs=[
                pl.BlockSpec((tile_rows, _LANES), in_map),
                pl.BlockSpec((tile_rows, _LANES), in_map),
            ],
            out_specs=[
                pl.BlockSpec((8, _LANES), lambda p, i: (p, 0)),
                pl.BlockSpec((8, _LANES), lambda p, i: (p, 0)),
            ],
        ),
        compiler_params=pltpu.CompilerParams(
            dimension_semantics=("parallel", "arbitrary"),
            vmem_limit_bytes=_VMEM_LIMIT_BYTES,
        ),
    )(pred2d, gt2d)

    # Tiny XLA epilogue: single cross-lane reduce over lane-dense partials.
    return jnp.sum(part_sum) / (jnp.sum(part_cnt) + jnp.float32(0.0001))


def _point_loss_ref(pred, gt):
    pred = pred.astype(jnp.float32)
    gt = gt.astype(jnp.float32)
    mask = (gt > 0.0).astype(jnp.float32)
    loss = jnp.sum(mask * (pred - gt) ** 2)
    return loss / (jnp.sum(mask) + 0.0001)


if __name__ == "__main__":
    key = jax.random.PRNGKey(0)
    k1, k2 = jax.random.split(key)

    # Small NCHW shapes consistent with a dense-prediction loss: (2, 4, 16, 16).
    pred = jax.random.normal(k1, (2, 4, 16, 16), dtype=jnp.float32)
    gt = jax.random.normal(k2, (2, 4, 16, 16), dtype=jnp.float32)

    loss = point_loss(pred, gt)
    loss = jax.block_until_ready(loss)

    ref = _point_loss_ref(pred, gt)
    assert jnp.allclose(loss, ref, rtol=1e-5, atol=1e-6), (loss, ref)

    print("KERNEL_OK")
</pallas_src>

<mosaic_0001>
module attributes {stable_mosaic.version = 11 : i64} {
  func.func @_point_loss_kernel(%arg0: i32, %arg1: i32, %arg2: memref<16x128xf32, #tpu.memory_space<vmem>>, %arg3: memref<16x128xf32, #tpu.memory_space<vmem>>, %arg4: memref<8x128xf32, #tpu.memory_space<vmem>>, %arg5: memref<8x128xf32, #tpu.memory_space<vmem>>) attributes {dimension_semantics = [#tpu.dimension_semantics<parallel>, #tpu.dimension_semantics<arbitrary>], iteration_bounds = array<i64: 1, 1>, scalar_prefetch = 0 : i64, scratch_operands = 0 : i64, tpu.core_type = #tpu.core_type<tc>, window_params = [{transform_indices = @transform_0, window_bounds = array<i64: 16, 128>}, {transform_indices = @transform_1, window_bounds = array<i64: 16, 128>}, {transform_indices = @transform_2, window_bounds = array<i64: 8, 128>}, {transform_indices = @transform_3, window_bounds = array<i64: 8, 128>}]} {
    %c0_i32 = arith.constant 0 : i32
    %0 = arith.cmpi eq, %arg1, %c0_i32 : i32
    %1 = arith.extui %0 : i1 to i32
    %c0_i32_0 = arith.constant 0 : i32
    %2 = arith.cmpi ne, %1, %c0_i32_0 : i32
    scf.if %2 {
      %cst_17 = arith.constant 0.000000e+00 : f32
      %24 = vector.broadcast %cst_17 : f32 to vector<8x128xf32>
      %c0_18 = arith.constant 0 : index
      %c0_19 = arith.constant 0 : index
      %25 = vector.load %arg4[%c0_18, %c0_19] : memref<8x128xf32, #tpu.memory_space<vmem>>, vector<8x128xf32>
      tpu.vector_store %arg4[%c0_18, %c0_19], %24 {strides = array<i32>} : memref<8x128xf32, #tpu.memory_space<vmem>>, vector<8x128xf32>,
      %cst_20 = arith.constant 0.000000e+00 : f32
      %26 = vector.broadcast %cst_20 : f32 to vector<8x128xf32>
      %c0_21 = arith.constant 0 : index
      %c0_22 = arith.constant 0 : index
      %27 = vector.load %arg5[%c0_21, %c0_22] : memref<8x128xf32, #tpu.memory_space<vmem>>, vector<8x128xf32>
      tpu.vector_store %arg5[%c0_21, %c0_22], %26 {strides = array<i32>} : memref<8x128xf32, #tpu.memory_space<vmem>>, vector<8x128xf32>,
    } else {
    }
    %c0 = arith.constant 0 : index
    %c0_1 = arith.constant 0 : index
    %3 = vector.load %arg3[%c0, %c0_1] : memref<16x128xf32, #tpu.memory_space<vmem>>, vector<16x128xf32>
    %c0_2 = arith.constant 0 : index
    %c0_3 = arith.constant 0 : index
    %4 = vector.load %arg2[%c0_2, %c0_3] : memref<16x128xf32, #tpu.memory_space<vmem>>, vector<16x128xf32>
    %cst = arith.constant 0.000000e+00 : f32
    %5 = vector.broadcast %cst : f32 to vector<16x128xf32>
    %6 = arith.cmpf ogt, %3, %5 : vector<16x128xf32>
    %7 = arith.subf %4, %3 : vector<16x128xf32>
    %cst_4 = arith.constant 0.000000e+00 : f32
    %8 = vector.broadcast %cst_4 : f32 to vector<16x128xf32>
    %9 = arith.select %6, %7, %8 : vector<16x128xi1>, vector<16x128xf32>
    %cst_5 = arith.constant 1.000000e+00 : f32
    %cst_6 = arith.constant 0.000000e+00 : f32
    %10 = vector.broadcast %cst_5 : f32 to vector<16x128xf32>
    %11 = vector.broadcast %cst_6 : f32 to vector<16x128xf32>
    %12 = arith.select %6, %10, %11 : vector<16x128xi1>, vector<16x128xf32>
    %c0_7 = arith.constant 0 : index
    %c0_8 = arith.constant 0 : index
    %13 = vector.load %arg4[%c0_7, %c0_8] : memref<8x128xf32, #tpu.memory_space<vmem>>, vector<8x128xf32>
    %14 = arith.mulf %9, %9 : vector<16x128xf32>
    %15 = vector.shape_cast %14 : vector<16x128xf32> to vector<2x8x128xf32>
    %cst_9 = arith.constant dense<0.000000e+00> : vector<8x128xf32>
    %16 = vector.multi_reduction <add>, %15, %cst_9 [0] : vector<2x8x128xf32> to vector<8x128xf32>
    %17 = arith.addf %13, %16 : vector<8x128xf32>
    %c0_10 = arith.constant 0 : index
    %c0_11 = arith.constant 0 : index
    %18 = vector.load %arg4[%c0_10, %c0_11] : memref<8x128xf32, #tpu.memory_space<vmem>>, vector<8x128xf32>
    tpu.vector_store %arg4[%c0_10, %c0_11], %17 {strides = array<i32>} : memref<8x128xf32, #tpu.memory_space<vmem>>, vector<8x128xf32>,
    %c0_12 = arith.constant 0 : index
    %c0_13 = arith.constant 0 : index
    %19 = vector.load %arg5[%c0_12, %c0_13] : memref<8x128xf32, #tpu.memory_space<vmem>>, vector<8x128xf32>
    %20 = vector.shape_cast %12 : vector<16x128xf32> to vector<2x8x128xf32>
    %cst_14 = arith.constant dense<0.000000e+00> : vector<8x128xf32>
    %21 = vector.multi_reduction <add>, %20, %cst_14 [0] : vector<2x8x128xf32> to vector<8x128xf32>
    %22 = arith.addf %19, %21 : vector<8x128xf32>
    %c0_15 = arith.constant 0 : index
    %c0_16 = arith.constant 0 : index
    %23 = vector.load %arg5[%c0_15, %c0_16] : memref<8x128xf32, #tpu.memory_space<vmem>>, vector<8x128xf32>
    tpu.vector_store %arg5[%c0_15, %c0_16], %22 {strides = array<i32>} : memref<8x128xf32, #tpu.memory_space<vmem>>, vector<8x128xf32>,
    return
  }
  func.func @transform_0(%arg0: i32, %arg1: i32) -> (i32, i32) {
    %c1_i32 = arith.constant 1 : i32
    %0 = arith.muli %arg0, %c1_i32 : i32
    %1 = arith.addi %0, %arg1 : i32
    %c0_i32 = arith.constant 0 : i32
    %2 = arith.minsi %1, %c0_i32 : i32
    %c0_i32_0 = arith.constant 0 : i32
    %c0_i32_1 = arith.constant 0 : i32
    return %2, %c0_i32_0 : i32, i32
  }
  func.func @transform_1(%arg0: i32, %arg1: i32) -> (i32, i32) {
    %c1_i32 = arith.constant 1 : i32
    %0 = arith.muli %arg0, %c1_i32 : i32
    %1 = arith.addi %0, %arg1 : i32
    %c0_i32 = arith.constant 0 : i32
    %2 = arith.minsi %1, %c0_i32 : i32
    %c0_i32_0 = arith.constant 0 : i32
    %c0_i32_1 = arith.constant 0 : i32
    return %2, %c0_i32_0 : i32, i32
  }
  func.func @transform_2(%arg0: i32, %arg1: i32) -> (i32, i32) {
    %c0_i32 = arith.constant 0 : i32
    %c0_i32_0 = arith.constant 0 : i32
    return %arg0, %c0_i32 : i32, i32
  }
  func.func @transform_3(%arg0: i32, %arg1: i32) -> (i32, i32) {
    %c0_i32 = arith.constant 0 : i32
    %c0_i32_0 = arith.constant 0 : i32
    return %arg0, %c0_i32 : i32, i32
  }
}

</mosaic_0001>

<llo_original>
// kernel: point_loss.1
$region0: #{point_loss.1}
  #allocation0 [shape = 'u32[]', space=smem, size = 0x4, offset = 0x4, fixed_abs, tag = 'smem constant byte address 0x4 - core index']
  #allocation1 [shape = 'u32[144,128]{1,0:T(1,128)}', space=vmem, size = 0x12000, scoped, tag = 'internal scratch']
  %s0 = inlined_call_operand.vmem [shape: f32[16,128], index: 0, kind: input, shape index: {}]
  %s1 = inlined_call_operand.vmem [shape: f32[16,128], index: 1, kind: input, shape index: {}]
  %s2 = inlined_call_operand.vmem [shape: f32[8,128], index: 2, kind: output, shape index: {0}]
  %s3 = inlined_call_operand.vmem [shape: f32[8,128], index: 3, kind: output, shape index: {1}]
  %4 = xla_tuple %s2, %s3
  %s5 = sld [smem:[#allocation0]]
  $region30: #{point_loss.1} parent=0
    _
  %s7 = ssub.s32 1, %s5
  %s8 = scalar_select 0, %s7, %s5
  // Predicated region
  $region2: #{point_loss.1} parent=0 // pred_check
    _
  $region3: #{point_loss.1} parent=0 // pred_check_branch
    %10 = sbr.rel (0) target = $region5
  $region4: #{point_loss.1} parent=0 // pred_region
    %s11 = sadd.s32 0, 0
    %p12 = scmp.lt.s32.totalorder %s11, 0
    %s13 = scalar_select %p12, %s11, 0
    %s14 = smul.u32 2, %s13
    %p15 = scmp.lt.s32.totalorder %s14, 1
    %s16 = scalar_select %p15, %s14, 1
    %s17 = smul.addr %s16, 8
    %s18 = scalar_lea.vmem %s0, %s17
    %s19 = sadd.s32 0, 0
    %p20 = scmp.lt.s32.totalorder %s19, 0
    %s21 = scalar_select %p20, %s19, 0
    %s22 = smul.u32 2, %s21
  $region5: #{point_loss.1} parent=0 // pred_fallthru
    _
  // Predicated region
  $region6: #{point_loss.1} parent=0 // pred_check
    _
  $region7: #{point_loss.1} parent=0 // pred_check_branch
    %24 = sbr.rel (0) target = $region9
  $region8: #{point_loss.1} parent=0 // pred_region
    %s25 = sadd.s32 0, 0
    %p26 = scmp.lt.s32.totalorder %s25, 0
    %s27 = scalar_select %p26, %s25, 0
    %s28 = smul.u32 2, %s27
    %p29 = scmp.lt.s32.totalorder %s28, 1
    %s30 = scalar_select %p29, %s28, 1
    %s31 = smul.addr %s30, 8
    %s32 = scalar_lea.vmem %s1, %s31
    %s33 = sadd.s32 0, 0
    %p34 = scmp.lt.s32.totalorder %s33, 0
    %s35 = scalar_select %p34, %s33, 0
    %s36 = smul.u32 2, %s35
  $region9: #{point_loss.1} parent=0 // pred_fallthru
    _
  %s37 = sadd.s32 0, 0
  %p38 = scmp.lt.s32.totalorder %s37, 0
  %s39 = scalar_select %p38, %s37, 0
  %s40 = smul.u32 2, %s39
  %p41 = scmp.lt.s32.totalorder %s40, 1
  %s42 = scalar_select %p41, %s40, 1
  %s43 = smul.addr %s42, 8
  %s44 = scalar_lea.vmem %s0, %s43
  %s45 = sadd.s32 0, 0
  %p46 = scmp.lt.s32.totalorder %s45, 0
  %s47 = scalar_select %p46, %s45, 0
  %s48 = smul.u32 2, %s47
  %p49 = scmp.lt.s32.totalorder %s48, 1
  %s50 = scalar_select %p49, %s48, 1
  %s51 = smul.addr %s50, 8
  %s52 = scalar_lea.vmem %s1, %s51
  %s53 = sadd.s32 0, 0
  %p54 = scmp.lt.s32.totalorder %s53, 0
  %s55 = scalar_select %p54, %s53, 0
  %s56 = smul.u32 2, %s55
  %p57 = scmp.lt.s32.totalorder %s56, 1
  %s58 = scalar_select %p57, %s56, 1
  %s59 = smul.addr %s58, 8
  %s60 = scalar_lea.vmem %s0, %s59
  %s61 = sadd.s32 0, 0
  %p62 = scmp.lt.s32.totalorder %s61, 0
  %s63 = scalar_select %p62, %s61, 0
  %s64 = smul.u32 2, %s63
  %s65 = sadd.s32 0, 0
  %p66 = scmp.lt.s32.totalorder %s65, 0
  %s67 = scalar_select %p66, %s65, 0
  %s68 = smul.u32 2, %s67
  %p69 = scmp.lt.s32.totalorder %s68, 1
  %s70 = scalar_select %p69, %s68, 1
  %s71 = smul.addr %s70, 8
  %s72 = scalar_lea.vmem %s1, %s71
  %s73 = sadd.s32 0, 0
  %p74 = scmp.lt.s32.totalorder %s73, 0
  %s75 = scalar_select %p74, %s73, 0
  %s76 = smul.u32 2, %s75
  %p77 = scmp.eq.s32.totalorder 0, 0
  // Predicated region
  $region10: #{point_loss.1} parent=0 // pred_check
    %p78 = pneg %p77
  $region11: #{point_loss.1} parent=0 // pred_check_branch
    %80 = sbr.rel (%p78) target = $region13
  $region12: #{point_loss.1} parent=0 // pred_region
    %81 = vst [vmem:[%s2] sm:$0xff] 0.0
    %82 = vst [vmem:[%s3] sm:$0xff] 0.0
  $region13: #{point_loss.1} parent=0 // pred_fallthru
    _
  %v83 = vld [vmem:[%s72] sm:$0xff]
  %v84 = vld [vmem:[%s72 + $0x8] sm:$0xff]
  %v85 = vld [vmem:[%s60] sm:$0xff]
  %v86 = vld [vmem:[%s60 + $0x8] sm:$0xff]
  %vm87 = vcmp.gt.f32.partialorder %v83, 0.0
  %vm88 = vcmp.gt.f32.partialorder %v84, 0.0
  %v89 = vsub.f32 %v85, %v83
  %v90 = vsub.f32 %v86, %v84
  %v91 = vsel %vm87, %v89, 0.0
  %v92 = vsel %vm88, %v90, 0.0
  %v93 = vsel %vm87, 1.0, 0.0
  %v94 = vsel %vm88, 1.0, 0.0
  %v95 = vld [vmem:[%s2] sm:$0xff]
  %v96 = vmul.f32 %v91, %v91
  %v97 = vmul.f32 %v92, %v92
  %v98 = vadd.f32 %v96, %v97
  %v99 = vadd.f32 %v95, %v98
  %100 = vst [vmem:[%s2] sm:$0xff] %v99
  %v101 = vld [vmem:[%s3] sm:$0xff]
  %v102 = vadd.f32 %v93, %v94
  %v103 = vadd.f32 %v101, %v102
  %104 = vst [vmem:[%s3] sm:$0xff] %v103
  // Predicated region
  $region14: #{point_loss.1} parent=0 // pred_check
    _
  $region15: #{point_loss.1} parent=0 // pred_check_branch
    %106 = sbr.rel (0) target = $region17
  $region16: #{point_loss.1} parent=0 // pred_region
    _
  $region17: #{point_loss.1} parent=0 // pred_fallthru
    _
  // Predicated region
  $region18: #{point_loss.1} parent=0 // pred_check
    _
  $region19: #{point_loss.1} parent=0 // pred_check_branch
    %108 = sbr.rel (0) target = $region21
  $region20: #{point_loss.1} parent=0 // pred_region
    _
  $region21: #{point_loss.1} parent=0 // pred_fallthru
    _
  // Predicated region
  $region22: #{point_loss.1} parent=0 // pred_check
    _
  $region23: #{point_loss.1} parent=0 // pred_check_branch
    %110 = sbr.rel (0) target = $region25
  $region24: #{point_loss.1} parent=0 // pred_region
    _
  $region25: #{point_loss.1} parent=0 // pred_fallthru
    _
  // Predicated region
  $region26: #{point_loss.1} parent=0 // pred_check
    _
  $region27: #{point_loss.1} parent=0 // pred_check_branch
    %112 = sbr.rel (0) target = $region29
  $region28: #{point_loss.1} parent=0 // pred_region
    _
  $region29: #{point_loss.1} parent=0 // pred_fallthru
    _

</llo_original>
